<compile_context>
chip_gen: v7x
topology: tpu7x:2x2x1
jax: 0.10.0
libtpu: 0.0.40
codegen_flags: <defaults>
</compile_context>

<pallas_src>
import functools
import math

import jax
import jax.numpy as jnp
from jax.experimental import pallas as pl
from jax.experimental.pallas import tpu as pltpu

EPS = 1e-5
# Explicit scoped-VMEM budget: enough for resident weights + 512-row tiles
# (~21 MiB worst case at ImageNet sizes), comfortably below v7x's 64 MiB
# physical VMEM and v5e/v6e's 128 MiB.
VMEM_LIMIT = 48 * 1024 * 1024


def _round_up(x, m):
    return (x + m - 1) // m * m


def _cpad(c):
    """Channel count padded to the 128-lane boundary."""
    return _round_up(c, 128)


def _m_tile(m):
    """Row tile for matmul grids.  Weights are VMEM-resident (gn == 1), so
    keep >= 2 row blocks once M allows it (v7x has 2 TensorCores) and move to
    512-row blocks for arithmetic intensity when M is large."""
    if m <= 256:
        return m          # single block; (8,128) rule satisfied via full-dim
    if m <= 1024:
        return 256
    return 512


def _row_tile(m, lanes):
    """Row tile for the element-wise (affine / maxpool) kernels: lane-narrow
    layers get taller row tiles so the per-step overhead amortizes."""
    if lanes <= 256:
        cap = 2048
    elif lanes <= 512:
        cap = 1024
    else:
        cap = 512
    return m if m <= cap else cap


# ----------------------------- Pallas kernels ------------------------------

def _mm_stats_kernel(a_ref, b_ref, y_ref, s_ref, *, m_total, tm):
    """bf16 matmul (weights VMEM-resident, single K step) with fused
    per-channel sum / sum-of-squares (BatchNorm batch statistics) packed into
    sublanes 0/1 of one per-M-block stats output."""
    acc = jnp.dot(a_ref[...], b_ref[...], preferred_element_type=jnp.float32)
    y_ref[...] = acc.astype(y_ref.dtype)
    if m_total % tm == 0:
        accv = acc
    else:
        # Partial last block: mask rows beyond M (they hold stale VMEM data).
        rows = (jax.lax.broadcasted_iota(jnp.int32, (tm, 1), 0)
                + pl.program_id(0) * tm)
        accv = jnp.where(rows < m_total, acc, 0.0)
    s = jnp.sum(accv, axis=0, keepdims=True)
    q = jnp.sum(accv * accv, axis=0, keepdims=True)
    pad = jnp.zeros((6, s.shape[1]), jnp.float32)
    s_ref[...] = jnp.concatenate([s, q, pad], axis=0)[None]


def _mm_bias_kernel(a_ref, b_ref, bias_ref, o_ref):
    """bf16 matmul with the bias folded into the epilogue (fc layer)."""
    acc = jnp.dot(a_ref[...], b_ref[...], preferred_element_type=jnp.float32)
    o_ref[...] = acc + bias_ref[...]


def _conv3_kernel(x_ref, w_ref, y_ref, s_ref, *, oh, ow):
    """Direct 3x3 / stride-1 convolution for one image.

    x_ref : (1, (OH+2)*OW, 3*C)  width-im2col'd, spatially padded, flattened
    w_ref : (3, 3*C, Cop)        one (3*C, Cop) weight slab per kh tap
    y_ref : (1, OH*OW, Cop)      conv output (bf16)
    s_ref : (1, 8, Cop)          per-image BN partial stats (sum / sumsq)

    Because the width taps are already folded into channels, the three kh taps
    are contiguous row windows of the flattened input, so the whole conv is
    three shifted MXU matmuls -- no 9x im2col patch matrix in HBM.
    """
    m = oh * ow
    acc = jnp.dot(x_ref[0, pl.ds(0, m), :], w_ref[0],
                  preferred_element_type=jnp.float32)
    acc = acc + jnp.dot(x_ref[0, pl.ds(ow, m), :], w_ref[1],
                        preferred_element_type=jnp.float32)
    acc = acc + jnp.dot(x_ref[0, pl.ds(2 * ow, m), :], w_ref[2],
                        preferred_element_type=jnp.float32)
    y_ref[...] = acc[None].astype(y_ref.dtype)
    s = jnp.sum(acc, axis=0, keepdims=True)
    q = jnp.sum(acc * acc, axis=0, keepdims=True)
    pad = jnp.zeros((6, s.shape[1]), jnp.float32)
    s_ref[...] = jnp.concatenate([s, q, pad], axis=0)[None]


def _affine_kernel(y_ref, s_ref, b_ref, o_ref, *, relu):
    out = y_ref[...].astype(jnp.float32) * s_ref[...] + b_ref[...]
    if relu:
        out = jnp.maximum(out, 0.0)
    o_ref[...] = out.astype(o_ref.dtype)


def _affine_res_kernel(y_ref, s_ref, b_ref, r_ref, o_ref, *, relu):
    out = (y_ref[...].astype(jnp.float32) * s_ref[...] + b_ref[...]
           + r_ref[...].astype(jnp.float32))
    if relu:
        out = jnp.maximum(out, 0.0)
    o_ref[...] = out.astype(o_ref.dtype)


def _maxpool9_kernel(t0, t1, t2, t3, t4, t5, t6, t7, t8, o_ref):
    m = jnp.maximum(t0[...], t1[...])
    m = jnp.maximum(m, t2[...])
    m = jnp.maximum(m, t3[...])
    m = jnp.maximum(m, t4[...])
    m = jnp.maximum(m, t5[...])
    m = jnp.maximum(m, t6[...])
    m = jnp.maximum(m, t7[...])
    m = jnp.maximum(m, t8[...])
    o_ref[...] = m


def _avgpool_kernel(x_ref, o_ref, *, denom):
    o_ref[...] = jnp.sum(x_ref[...].astype(jnp.float32), axis=1) / denom


# ----------------------------- Pallas wrappers ------------------------------

def pallas_matmul_bnstats(a, b):
    """a: (M, K) activations/patches; b: (K, Np) weights with Np % 128 == 0.
    The weight gets a single full-extent block with a constant index_map
    (VMEM-resident, DMA'd once).  Returns (y (M, Np) bf16, mean, var) with the
    BatchNorm batch statistics fused into the matmul epilogue."""
    a = a.astype(jnp.bfloat16)
    b = b.astype(jnp.bfloat16)
    m, k = a.shape
    _, np_ = b.shape
    tm = _m_tile(m)
    gm = pl.cdiv(m, tm)
    y, s = pl.pallas_call(
        functools.partial(_mm_stats_kernel, m_total=m, tm=tm),
        out_shape=(jax.ShapeDtypeStruct((m, np_), jnp.bfloat16),
                   jax.ShapeDtypeStruct((gm, 8, np_), jnp.float32)),
        grid=(gm,),
        in_specs=[pl.BlockSpec((tm, k), lambda i: (i, 0)),
                  pl.BlockSpec((k, np_), lambda i: (0, 0))],   # resident B
        out_specs=(pl.BlockSpec((tm, np_), lambda i: (i, 0)),
                   pl.BlockSpec((1, 8, np_), lambda i: (i, 0, 0))),
        compiler_params=pltpu.CompilerParams(
            dimension_semantics=("parallel",),
            vmem_limit_bytes=VMEM_LIMIT),
    )(a, b)
    mean = jnp.sum(s[:, 0, :], axis=0) / m
    # E[x^2] - mean^2 in f32 can cancel slightly negative: clamp before rsqrt.
    var = jnp.maximum(jnp.sum(s[:, 1, :], axis=0) / m - mean * mean, 0.0)
    return y, mean, var


def pallas_matmul_bias(a, b, bias):
    """Plain resident-weight matmul with bias added in the epilogue (fc)."""
    a = a.astype(jnp.bfloat16)
    b = b.astype(jnp.bfloat16)
    m, k = a.shape
    _, np_ = b.shape
    bias_row = jnp.pad(bias.astype(jnp.float32),
                       (0, np_ - bias.shape[0])).reshape(1, np_)
    tm = _m_tile(m)
    gm = pl.cdiv(m, tm)
    return pl.pallas_call(
        _mm_bias_kernel,
        out_shape=jax.ShapeDtypeStruct((m, np_), jnp.float32),
        grid=(gm,),
        in_specs=[pl.BlockSpec((tm, k), lambda i: (i, 0)),
                  pl.BlockSpec((k, np_), lambda i: (0, 0)),
                  pl.BlockSpec((1, np_), lambda i: (0, 0))],
        out_specs=pl.BlockSpec((tm, np_), lambda i: (i, 0)),
        compiler_params=pltpu.CompilerParams(
            dimension_semantics=("parallel",),
            vmem_limit_bytes=VMEM_LIMIT),
    )(a, b, bias_row)


def pallas_affine(y, scale, bias, residual=None, relu=False):
    """out = maybe_relu(y * scale + bias [+ residual]); operates on the exact
    (M, Np) activation (Np already lane-padded), outputs bf16."""
    m, np_ = y.shape
    tm = _row_tile(m, np_)
    gm = pl.cdiv(m, tm)
    s2 = scale.reshape(1, np_).astype(jnp.float32)
    b2 = bias.reshape(1, np_).astype(jnp.float32)
    row_spec = pl.BlockSpec((tm, np_), lambda i: (i, 0))
    vec_spec = pl.BlockSpec((1, np_), lambda i: (0, 0))
    cparams = pltpu.CompilerParams(dimension_semantics=("parallel",),
                                   vmem_limit_bytes=VMEM_LIMIT)
    if residual is None:
        return pl.pallas_call(
            functools.partial(_affine_kernel, relu=relu),
            out_shape=jax.ShapeDtypeStruct((m, np_), jnp.bfloat16),
            grid=(gm,),
            in_specs=[row_spec, vec_spec, vec_spec],
            out_specs=row_spec,
            compiler_params=cparams,
        )(y, s2, b2)
    return pl.pallas_call(
        functools.partial(_affine_res_kernel, relu=relu),
        out_shape=jax.ShapeDtypeStruct((m, np_), jnp.bfloat16),
        grid=(gm,),
        in_specs=[row_spec, vec_spec, vec_spec, row_spec],
        out_specs=row_spec,
        compiler_params=cparams,
    )(y, s2, b2, residual)


def pallas_maxpool(x, kh=3, kw=3, stride=2, pad=1):
    """3x3/s2/p1 max pooling on channel-padded NHWC (single layer in the net).
    TODO(synk): replace the 9 XLA-materialized taps with a halo'd row-block
    kernel reading the padded input once."""
    n, h, w, c = x.shape
    xp = jnp.pad(x, ((0, 0), (pad, pad), (pad, pad), (0, 0)),
                 constant_values=-jnp.inf)
    oh = (h + 2 * pad - kh) // stride + 1
    ow = (w + 2 * pad - kw) // stride + 1
    m = n * oh * ow
    taps = [xp[:, i:i + stride * (oh - 1) + 1:stride,
               j:j + stride * (ow - 1) + 1:stride, :].reshape(m, c)
            for i in range(kh) for j in range(kw)]
    tm = _row_tile(m, c)
    gm = pl.cdiv(m, tm)
    out = pl.pallas_call(
        _maxpool9_kernel,
        out_shape=jax.ShapeDtypeStruct((m, c), x.dtype),
        grid=(gm,),
        in_specs=[pl.BlockSpec((tm, c), lambda i: (i, 0))] * (kh * kw),
        out_specs=pl.BlockSpec((tm, c), lambda i: (i, 0)),
        compiler_params=pltpu.CompilerParams(
            dimension_semantics=("parallel",),
            vmem_limit_bytes=VMEM_LIMIT),
    )(*taps)
    return out.reshape(n, oh, ow, c)


def pallas_avgpool(x):
    """Global average pool: (N, H, W, C) -> (N, C) f32."""
    n, h, w, c = x.shape
    xr = x.reshape(n, h * w, c)
    return pl.pallas_call(
        functools.partial(_avgpool_kernel, denom=float(h * w)),
        out_shape=jax.ShapeDtypeStruct((n, c), jnp.float32),
        grid=(1,),
        in_specs=[pl.BlockSpec((n, h * w, c), lambda i: (0, 0, 0))],
        out_specs=pl.BlockSpec((n, c), lambda i: (0, 0)),
        compiler_params=pltpu.CompilerParams(vmem_limit_bytes=VMEM_LIMIT),
    )(xr)


# ----------------------------- conv / bn glue -------------------------------

def extract_patches(x, kh, kw, stride, pad):
    """NHWC im2col -> ((N*OH*OW, kh*kw*C), (N, OH, OW)).  Used only for the
    7x7 stem conv and the three stride-2 3x3 convs."""
    n, h, w, c = x.shape
    if pad > 0:
        x = jnp.pad(x, ((0, 0), (pad, pad), (pad, pad), (0, 0)))
    oh = (h + 2 * pad - kh) // stride + 1
    ow = (w + 2 * pad - kw) // stride + 1
    cols = [x[:, i:i + stride * (oh - 1) + 1:stride,
              j:j + stride * (ow - 1) + 1:stride, :]
            for i in range(kh) for j in range(kw)]
    p = jnp.concatenate(cols, axis=-1)
    return p.reshape(n * oh * ow, kh * kw * c), (n, oh, ow)


def _bn_affine_params(bn, mean, var):
    # Training-mode BN (biased batch variance), matching PyTorch train().
    scale = bn["gamma"] * jax.lax.rsqrt(var + EPS)
    return scale, bn["beta"] - mean * scale


def conv1x1_bn_act(x, conv, bn, relu, residual=None, stride=1):
    """1x1 Conv (no bias) + training-mode BN (+ residual) (+ ReLU).  The chain
    stays in the exact (M, Cpad) matmul layout; all reshapes are free."""
    if stride > 1:
        x = x[:, ::stride, ::stride, :]
    n, h, w, cin = x.shape
    m = n * h * w
    y, mean, var = pallas_matmul_bnstats(x.reshape(m, cin), conv["w"])
    scale, bias = _bn_affine_params(bn, mean, var)
    res2d = None if residual is None else residual.reshape(m, -1)
    out = pallas_affine(y, scale, bias, residual=res2d, relu=relu)
    return out.reshape(n, h, w, conv["w"].shape[-1])


def conv_im2col_bn_act(x, w, bn, relu, k, stride, pad):
    patches, (n, oh, ow) = extract_patches(x, k, k, stride, pad)
    y, mean, var = pallas_matmul_bnstats(patches, w)
    scale, bias = _bn_affine_params(bn, mean, var)
    out = pallas_affine(y, scale, bias, relu=relu)
    return out.reshape(n, oh, ow, w.shape[-1])


def _conv3x3_direct(x, conv, bn, relu):
    """3x3 / stride-1 conv: width taps folded into the channel dim once in XLA
    (3x, not 9x), height taps as three contiguous shifted matmuls inside a
    per-image Pallas kernel, BN stats fused into the epilogue."""
    n, h, w, c = x.shape
    cop = conv["w"].shape[-1]
    xp = jnp.pad(x, ((0, 0), (1, 1), (1, 1), (0, 0)))
    xw = jnp.concatenate([xp[:, :, j:j + w, :] for j in range(3)], axis=-1)
    xw = xw.reshape(n, (h + 2) * w, 3 * c).astype(jnp.bfloat16)
    y, s = pl.pallas_call(
        functools.partial(_conv3_kernel, oh=h, ow=w),
        out_shape=(jax.ShapeDtypeStruct((n, h * w, cop), jnp.bfloat16),
                   jax.ShapeDtypeStruct((n, 8, cop), jnp.float32)),
        grid=(n,),
        in_specs=[pl.BlockSpec((1, (h + 2) * w, 3 * c), lambda i: (i, 0, 0)),
                  pl.BlockSpec((3, 3 * c, cop), lambda i: (0, 0, 0))],
        out_specs=(pl.BlockSpec((1, h * w, cop), lambda i: (i, 0, 0)),
                   pl.BlockSpec((1, 8, cop), lambda i: (i, 0, 0))),
        compiler_params=pltpu.CompilerParams(
            dimension_semantics=("parallel",),
            vmem_limit_bytes=VMEM_LIMIT),
    )(xw, conv["w"])
    m = n * h * w
    mean = jnp.sum(s[:, 0, :], axis=0) / m
    var = jnp.maximum(jnp.sum(s[:, 1, :], axis=0) / m - mean * mean, 0.0)
    scale, bias = _bn_affine_params(bn, mean, var)
    out = pallas_affine(y.reshape(m, cop), scale, bias, relu=relu)
    return out.reshape(n, h, w, cop)


def conv3x3_bn_act(x, conv, bn, relu):
    if conv["stride"] == 1:
        try:
            out = _conv3x3_direct(x, conv, bn, relu)
            return jax.block_until_ready(out)
        except Exception:
            # Safety net: fall back to the proven im2col matmul path if the
            # direct kernel fails to lower/run on this backend.
            pass
    w = conv["w"]
    if w.ndim == 3:                       # (3, 3*C, Cop) -> (9*C, Cop)
        w = w.reshape(-1, w.shape[-1])
    return conv_im2col_bn_act(x, w, bn, relu, k=3, stride=conv["stride"],
                              pad=1)


# ----------------------------- model definition -----------------------------

def _init_params(key):
    keys = iter(jax.random.split(key, 128))

    def bn(c):
        cp = _cpad(c)
        return {"gamma": jnp.pad(jnp.ones((c,), jnp.float32), (0, cp - c)),
                "beta": jnp.zeros((cp,), jnp.float32)}

    def conv1x1(in_c, out_c):
        inp, outp = _cpad(in_c), _cpad(out_c)
        w = (jax.random.normal(next(keys), (in_c, out_c), jnp.float32)
             * (1.0 / math.sqrt(in_c)))
        w = jnp.pad(w, ((0, inp - in_c), (0, outp - out_c)))
        return {"w": w.astype(jnp.bfloat16)}

    def conv3x3(in_c, out_c, stride):
        inp, outp = _cpad(in_c), _cpad(out_c)
        w = (jax.random.normal(next(keys), (3, 3, in_c, out_c), jnp.float32)
             * (1.0 / math.sqrt(9 * in_c)))
        w = jnp.pad(w, ((0, 0), (0, 0), (0, inp - in_c), (0, outp - out_c)))
        if stride == 1:
            w = w.reshape(3, 3 * inp, outp)      # direct-conv layout
        else:
            w = w.reshape(9 * inp, outp)         # im2col layout
        return {"w": w.astype(jnp.bfloat16), "stride": stride}

    w1 = (jax.random.normal(next(keys), (7, 7, 3, 64), jnp.float32)
          * (1.0 / math.sqrt(7 * 7 * 3)))
    w1 = jnp.pad(w1, ((0, 0), (0, 0), (0, 0), (0, 64))).reshape(147, 128)
    params = {"conv1": {"w": w1.astype(jnp.bfloat16)}, "bn1": bn(64)}

    def make_stage(in_c, out_c, strides_list):
        blocks = []
        first = True
        for s in strides_list:
            blk = {"c1": conv1x1(in_c, out_c), "bn1": bn(out_c),
                   "c2": conv3x3(out_c, out_c, s[1]), "bn2": bn(out_c),
                   "c3": conv1x1(out_c, out_c * 4), "bn3": bn(out_c * 4),
                   "first": first}
            if first:
                blk["csc"] = conv1x1(in_c, out_c * 4)
                blk["bnsc"] = bn(out_c * 4)
                blk["sc_stride"] = s[1]
            blocks.append(blk)
            first = False
            in_c = out_c * 4
        return blocks, in_c

    in_c = 64
    stages = []
    for out_c, strides_list in [
            (64, [[1, 1, 1]] * 3),
            (128, [[1, 2, 1]] + [[1, 1, 1]] * 3),
            (256, [[1, 2, 1]] + [[1, 1, 1]] * 5),
            (512, [[1, 2, 1]] + [[1, 1, 1]] * 2)]:
        blocks, in_c = make_stage(in_c, out_c, strides_list)
        stages.append(blocks)
    params["stages"] = stages

    fc_w = (jax.random.normal(next(keys), (2048, 1000), jnp.float32)
            * (1.0 / math.sqrt(2048)))
    params["fc_w"] = jnp.pad(fc_w, ((0, 0), (0, 24))).astype(jnp.bfloat16)
    params["fc_b"] = jnp.zeros((1000,), jnp.float32)
    return params


def bottleneck_forward(x, blk):
    a1 = conv1x1_bn_act(x, blk["c1"], blk["bn1"], relu=True)
    a2 = conv3x3_bn_act(a1, blk["c2"], blk["bn2"], relu=True)
    if blk["first"]:
        res = conv1x1_bn_act(x, blk["csc"], blk["bnsc"], relu=False,
                             stride=blk["sc_stride"])
    else:
        res = x
    # out = relu(bn3(conv3(a2)) + shortcut(x)), add fused into the affine pass.
    return conv1x1_bn_act(a2, blk["c3"], blk["bn3"], relu=True, residual=res)


def resnet50_forward(params, x_nchw):
    # Convert PyTorch NCHW input to internal NHWC, bf16 activations.
    x = jnp.transpose(x_nchw, (0, 2, 3, 1)).astype(jnp.bfloat16)

    # conv1_1 (7x7/s2/p3) + conv1_2 (BatchNorm, no ReLU in the reference)
    x = conv_im2col_bn_act(x, params["conv1"]["w"], params["bn1"],
                           relu=False, k=7, stride=2, pad=3)

    # conv1_3 MaxPool 3x3 / s2 / p1
    x = pallas_maxpool(x, 3, 3, 2, 1)

    # conv2..conv5 stages
    for stage in params["stages"]:
        for blk in stage:
            x = bottleneck_forward(x, blk)

    # adaptive avg pool to (1, 1) + flatten
    pooled = pallas_avgpool(x)                       # (N, 2048) f32

    # fc: x @ W + b (bias fused into the matmul epilogue), slice padded lanes.
    logits = pallas_matmul_bias(pooled, params["fc_w"], params["fc_b"])
    return logits[:, :1000]


if __name__ == "__main__":
    key = jax.random.PRNGKey(0)
    pkey, xkey = jax.random.split(key)
    params = _init_params(pkey)
    # Small input consistent with the module: batch=2, 3 channels, 32x32.
    x = jax.random.normal(xkey, (2, 3, 32, 32), jnp.float32)

    logits = resnet50_forward(params, x)
    logits = jax.block_until_ready(logits)

    assert logits.shape == (2, 1000), logits.shape
    assert bool(jnp.all(jnp.isfinite(logits)))
    print("KERNEL_OK")
</pallas_src>

<mosaic_0001>
module attributes {stable_mosaic.version = 11 : i64} {
  func.func @_mm_stats_kernel(%arg0: i32, %arg1: memref<256x147xbf16, #tpu.memory_space<vmem>>, %arg2: memref<147x128xbf16, #tpu.memory_space<vmem>>, %arg3: memref<256x128xbf16, #tpu.memory_space<vmem>>, %arg4: memref<1x8x128xf32, #tpu.memory_space<vmem>>) attributes {dimension_semantics = [#tpu.dimension_semantics<parallel>], iteration_bounds = array<i64: 2>, scalar_prefetch = 0 : i64, scratch_operands = 0 : i64, tpu.core_type = #tpu.core_type<tc>, window_params = [{transform_indices = @transform_0, window_bounds = array<i64: 256, 147>}, {pipeline_mode = #tpu.pipeline_mode<synchronous>, transform_indices = @transform_1, window_bounds = array<i64: 147, 128>}, {transform_indices = @transform_2, window_bounds = array<i64: 256, 128>}, {transform_indices = @transform_3, window_bounds = array<i64: 1, 8, 128>}]} {
    %c0 = arith.constant 0 : index
    %c0_0 = arith.constant 0 : index
    %0 = vector.load %arg1[%c0, %c0_0] : memref<256x147xbf16, #tpu.memory_space<vmem>>, vector<256x147xbf16>
    %c0_1 = arith.constant 0 : index
    %c0_2 = arith.constant 0 : index
    %1 = vector.load %arg2[%c0_1, %c0_2] : memref<147x128xbf16, #tpu.memory_space<vmem>>, vector<147x128xbf16>
    %cst = arith.constant dense<0.000000e+00> : vector<256x128xf32>
    %2 = tpu.matmul %0, %1, %cst {dimension_numbers = #tpu.dot_dimension_numbers<[1], [0], [0], [1], [0, 0, 1, 1], [], []>} : vector<256x147xbf16>, vector<147x128xbf16>, vector<256x128xf32> -> vector<256x128xf32>
    %3 = arith.truncf %2 : vector<256x128xf32> to vector<256x128xbf16>
    %c0_3 = arith.constant 0 : index
    %c0_4 = arith.constant 0 : index
    %4 = vector.load %arg3[%c0_3, %c0_4] : memref<256x128xbf16, #tpu.memory_space<vmem>>, vector<256x128xbf16>
    tpu.vector_store %arg3[%c0_3, %c0_4], %3 {strides = array<i32>} : memref<256x128xbf16, #tpu.memory_space<vmem>>, vector<256x128xbf16>,
    %cst_5 = arith.constant dense<0.000000e+00> : vector<128xf32>
    %5 = vector.multi_reduction <add>, %2, %cst_5 [0] : vector<256x128xf32> to vector<128xf32>
    %6 = vector.shape_cast %5 : vector<128xf32> to vector<1x128xf32>
    %7 = arith.mulf %2, %2 : vector<256x128xf32>
    %cst_6 = arith.constant dense<0.000000e+00> : vector<128xf32>
    %8 = vector.multi_reduction <add>, %7, %cst_6 [0] : vector<256x128xf32> to vector<128xf32>
    %9 = vector.shape_cast %8 : vector<128xf32> to vector<1x128xf32>
    %cst_7 = arith.constant 0.000000e+00 : f32
    %10 = vector.broadcast %cst_7 : f32 to vector<6x128xf32>
    %11 = tpu.concatenate %6, %9, %10 in 0 : vector<1x128xf32>, vector<1x128xf32>, vector<6x128xf32> -> vector<8x128xf32>
    %12 = vector.shape_cast %11 : vector<8x128xf32> to vector<1x8x128xf32>
    %c0_8 = arith.constant 0 : index
    %c0_9 = arith.constant 0 : index
    %c0_10 = arith.constant 0 : index
    %13 = vector.load %arg4[%c0_8, %c0_9, %c0_10] : memref<1x8x128xf32, #tpu.memory_space<vmem>>, vector<1x8x128xf32>
    tpu.vector_store %arg4[%c0_8, %c0_9, %c0_10], %12 {strides = array<i32>} : memref<1x8x128xf32, #tpu.memory_space<vmem>>, vector<1x8x128xf32>,
    return
  }
  func.func @transform_0(%arg0: i32) -> (i32, i32) {
    %c0_i32 = arith.constant 0 : i32
    %c0_i32_0 = arith.constant 0 : i32
    return %arg0, %c0_i32 : i32, i32
  }
  func.func @transform_1(%arg0: i32) -> (i32, i32) {
    %c0_i32 = arith.constant 0 : i32
    %c0_i32_0 = arith.constant 0 : i32
    %c0_i32_1 = arith.constant 0 : i32
    return %c0_i32, %c0_i32_0 : i32, i32
  }
  func.func @transform_2(%arg0: i32) -> (i32, i32) {
    %c0_i32 = arith.constant 0 : i32
    %c0_i32_0 = arith.constant 0 : i32
    return %arg0, %c0_i32 : i32, i32
  }
  func.func @transform_3(%arg0: i32) -> (i32, i32, i32) {
    %c0_i32 = arith.constant 0 : i32
    %c0_i32_0 = arith.constant 0 : i32
    %c0_i32_1 = arith.constant 0 : i32
    return %arg0, %c0_i32, %c0_i32_0 : i32, i32, i32
  }
}

</mosaic_0001>

<llo_original>
// kernel: tpu_custom_call.1
$region0: #{tpu_custom_call.1}
  #allocation0 [shape = 'u32[]', space=smem, size = 0x4, offset = 0x4, fixed_abs, tag = 'smem constant byte address 0x4 - core index']
  #allocation1 [shape = 'u32[144,128]{1,0:T(1,128)}', space=vmem, size = 0x12000, scoped, tag = 'internal scratch']
  %s0 = inlined_call_operand.vmem [shape: bf16[512,147], index: 0, kind: input, shape index: {}]
  %s1 = inlined_call_operand.vmem [shape: bf16[147,128], index: 1, kind: input, shape index: {}]
  %s2 = inlined_call_operand.hbm [shape: bf16[512,128], index: 2, kind: output, shape index: {0}]
  %s3 = inlined_call_operand.hbm [shape: f32[2,8,128], index: 3, kind: output, shape index: {1}]
  %4 = xla_tuple %s2, %s3
  %s5 = sld [smem:[#allocation0]]
  $region49: #{tpu_custom_call.1} parent=0
    _
  %s7 = ssub.s32 1, %s5
  %s8 = scalar_select 0, %s7, %s5
  $region1: #{tpu_custom_call.1} parent=0
    #allocation2 [shape = 'u8[131072]{0}', space=vmem, size = 0x20000, scoped, tag = 'output window, operand 0']
    #allocation3 [shape = 's32[2]{0}', space=sflag, size = 0x8, scoped, tag = 'scoped memory for tpu_custom_call.1']
    #allocation4 [shape = 'u8[8192]{0}', space=vmem, size = 0x2000, scoped, tag = 'output window, operand 1']
    #allocation5 [shape = 's32[2]{0}', space=sflag, size = 0x8, scoped, tag = 'scoped memory for tpu_custom_call.1']
    %9 = vsyncpa [#allocation3], 0
    %s10 = scalar_lea.sflag [#allocation3], 1
    %11 = vsyncpa %s10, 0
    %12 = vsyncpa [#allocation5], 0
    %s13 = scalar_lea.sflag [#allocation5], 1
    %14 = vsyncpa %s13, 0
    loop: start=0, step=1, limit=4
    $region2: #{tpu_custom_call.1} parent=1 // loop_pre_header
      _
    $region3: #{tpu_custom_call.1} parent=1 // loop_header
      %s16 = sphi 0, %s20
      %p17 = scmp.ge.s32.totalorder %s16, 4
      %s26 = sphi 0, %s28
      %s29 = sphi 0, %s26
      %s30 = sphi 0, %s29
      %s46 = sphi 0, %s30
      %s50 = sphi 0, %s50
      %s52 = sphi 0, %s50
      %s53 = sphi 0, %s52
      %s67 = sphi 0, %s53
      %s73 = sphi 0, %s75
      %s76 = sphi 0, %s73
      %s77 = sphi 0, %s76
      %s93 = sphi 0, %s77
      %s99 = sphi 0, %s101
      %s102 = sphi 0, %s99
      %s103 = sphi 0, %s102
      %s119 = sphi 0, %s103
    $region4: #{tpu_custom_call.1} parent=1 // loop_header_branch
      %19 = sbr.rel (%p17) target = $region8
    $region5: #{tpu_custom_call.1} parent=1 // loop_body
      %s21 = ssub.s32 %s16, 1
      %s22 = ssub.s32 %s16, 2
      %s23 = sadd.s32 %s16, 1
      %s24 = ssub.s32 %s16, %s23
      %p25 = scmp.eq.s32.totalorder %s24, 0
      %s27 = sadd.s32 %s26, 1
      %s28 = scalar_select %p25, %s26, %s27
      %p31 = pneg %p25
      %p32 = scmp.eq.s32.totalorder %s16, 1
      %p33 = por %p31, %p32
      %p34 = scmp.ne.s32.totalorder %s26, %s29
      %p35 = scmp.eq.s32.totalorder %s16, 0
      %p36 = por %p34, %p35
      %p37 = scmp.ne.s32.totalorder %s26, %s29
      %p38 = scmp.eq.s32.totalorder %s21, 1
      %p39 = por %p37, %p38
      %p40 = scmp.ne.s32.totalorder %s29, %s30
      %p41 = scmp.eq.s32.totalorder %s21, 0
      %p42 = por %p40, %p41
      %p43 = scmp.ne.s32.totalorder %s29, %s30
      %p44 = scmp.eq.s32.totalorder %s22, 1
      %p45 = por %p43, %p44
      %p47 = scmp.ne.s32.totalorder %s30, %s46
      %p48 = scmp.eq.s32.totalorder %s22, 0
      %p49 = por %p47, %p48
      %s51 = sadd.s32 %s50, 1
      %p54 = scmp.eq.s32.totalorder %s16, 1
      %p55 = scmp.ne.s32.totalorder %s50, %s52
      %p56 = scmp.eq.s32.totalorder %s16, 0
      %p57 = por %p55, %p56
      %p58 = scmp.ne.s32.totalorder %s50, %s52
      %p59 = scmp.eq.s32.totalorder %s21, 1
      %p60 = por %p58, %p59
      %p61 = scmp.ne.s32.totalorder %s52, %s53
      %p62 = scmp.eq.s32.totalorder %s21, 0
      %p63 = por %p61, %p62
      %p64 = scmp.ne.s32.totalorder %s52, %s53
      %p65 = scmp.eq.s32.totalorder %s22, 1
      %p66 = por %p64, %p65
      %p68 = scmp.ne.s32.totalorder %s53, %s67
      %p69 = scmp.eq.s32.totalorder %s22, 0
      %p70 = por %p68, %p69
      %s71 = ssub.s32 %s16, %s23
      %p72 = scmp.eq.s32.totalorder %s71, 0
      %s74 = sadd.s32 %s73, 1
      %s75 = scalar_select %p72, %s73, %s74
      %p78 = pneg %p72
      %p79 = scmp.eq.s32.totalorder %s16, 1
      %p80 = por %p78, %p79
      %p81 = scmp.ne.s32.totalorder %s73, %s76
      %p82 = scmp.eq.s32.totalorder %s16, 0
      %p83 = por %p81, %p82
      %p84 = scmp.ne.s32.totalorder %s73, %s76
      %p85 = scmp.eq.s32.totalorder %s21, 1
      %p86 = por %p84, %p85
      %p87 = scmp.ne.s32.totalorder %s76, %s77
      %p88 = scmp.eq.s32.totalorder %s21, 0
      %p89 = por %p87, %p88
      %p90 = scmp.ne.s32.totalorder %s76, %s77
      %p91 = scmp.eq.s32.totalorder %s22, 1
      %p92 = por %p90, %p91
      %p94 = scmp.ne.s32.totalorder %s77, %s93
      %p95 = scmp.eq.s32.totalorder %s22, 0
      %p96 = por %p94, %p95
      %s97 = ssub.s32 %s16, %s23
      %p98 = scmp.eq.s32.totalorder %s97, 0
      %s100 = sadd.s32 %s99, 1
      %s101 = scalar_select %p98, %s99, %s100
      %p104 = pneg %p98
      %p105 = scmp.eq.s32.totalorder %s16, 1
      %p106 = por %p104, %p105
      %p107 = scmp.ne.s32.totalorder %s99, %s102
      %p108 = scmp.eq.s32.totalorder %s16, 0
      %p109 = por %p107, %p108
      %p110 = scmp.ne.s32.totalorder %s99, %s102
      %p111 = scmp.eq.s32.totalorder %s21, 1
      %p112 = por %p110, %p111
      %p113 = scmp.ne.s32.totalorder %s102, %s103
      %p114 = scmp.eq.s32.totalorder %s21, 0
      %p115 = por %p113, %p114
      %p116 = scmp.ne.s32.totalorder %s102, %s103
      %p117 = scmp.eq.s32.totalorder %s22, 1
      %p118 = por %p116, %p117
      %p120 = scmp.ne.s32.totalorder %s103, %s119
      %p121 = scmp.eq.s32.totalorder %s22, 0
      %p122 = por %p120, %p121
      %p123 = scmp.le.s32.totalorder 1, %s16
      %p124 = scmp.lt.s32.totalorder %s16, 3
      %p125 = pnand %p123, %p124
      %p126 = pneg %p125
      // Predicated region
      $region9: #{tpu_custom_call.1} parent=5 // pred_check
        _
      $region10: #{tpu_custom_call.1} parent=5 // pred_check_branch
        %128 = sbr.rel (%p125) target = $region12
      $region11: #{tpu_custom_call.1} parent=5 // pred_region
        %s129 = ssub.s32 %s16, 1
        // Predicated region
        $region13: #{tpu_custom_call.1} parent=11 // pred_check
          %p130 = pneg %p63
        $region14: #{tpu_custom_call.1} parent=11 // pred_check_branch
          %132 = sbr.rel (%p130) target = $region16
        $region15: #{tpu_custom_call.1} parent=11 // pred_region
          _
        $region16: #{tpu_custom_call.1} parent=11 // pred_fallthru
          _
      $region12: #{tpu_custom_call.1} parent=5 // pred_fallthru
        _
      %p133 = scmp.lt.s32.totalorder %s16, 2
      // Predicated region
      $region17: #{tpu_custom_call.1} parent=5 // pred_check
        %p134 = pneg %p133
      $region18: #{tpu_custom_call.1} parent=5 // pred_check_branch
        %136 = sbr.rel (%p134) target = $region20
      $region19: #{tpu_custom_call.1} parent=5 // pred_region
        // Predicated region
        $region21: #{tpu_custom_call.1} parent=19 // pred_check
          %p137 = pneg %p36
        $region22: #{tpu_custom_call.1} parent=19 // pred_check_branch
          %139 = sbr.rel (%p137) target = $region24
        $region23: #{tpu_custom_call.1} parent=19 // pred_region
          %s140 = smul.u32 32, %s16
          %p141 = scmp.lt.s32.totalorder %s140, 63
          %s142 = scalar_select %p141, %s140, 63
          %s143 = smul.addr %s142, 2
          %s144 = smul.addr %s143, 4
          %s145 = scalar_lea.vmem %s0, %s144
          %s146 = smul.u32 32, %s16
        $region24: #{tpu_custom_call.1} parent=19 // pred_fallthru
          _
      $region20: #{tpu_custom_call.1} parent=5 // pred_fallthru
        _
      %p147 = scmp.le.s32.totalorder 1, %s16
      %p148 = scmp.lt.s32.totalorder %s16, 3
      %p149 = pnand %p147, %p148
      %p150 = pneg %p149
      // Predicated region
      $region25: #{tpu_custom_call.1} parent=5 // pred_check
        _
      $region26: #{tpu_custom_call.1} parent=5 // pred_check_branch
        %152 = sbr.rel (%p149) target = $region28
      $region27: #{tpu_custom_call.1} parent=5 // pred_region
        %s153 = ssub.s32 %s16, 1
        %s154 = smul.u32 32, %s21
        %p155 = scmp.lt.s32.totalorder %s154, 63
        %s156 = scalar_select %p155, %s154, 63
        %s157 = smul.addr %s156, 2
        %s158 = smul.addr %s157, 4
        %s159 = scalar_lea.vmem %s0, %s158
        %p160 = pneg %p42
        %p161 = pneg %p39
        %p162 = pneg %p63
        %p163 = pneg %p60
        %p164 = pneg %p89
        %p165 = pneg %p86
        %s166 = sand.u32 %s76, 1
        %s167 = scalar_lea.sflag [#allocation3], %s166
        %s168 = sand.u32 %s76, 1
        %s169 = smul.addr %s168, 128
        %s170 = scalar_lea.vmem [#allocation2], %s169
        %p171 = pneg %p115
        %p172 = pneg %p112
        %s173 = sand.u32 %s102, 1
        %s174 = scalar_lea.sflag [#allocation5], %s173
        %s175 = sand.u32 %s102, 1
        %s176 = smul.addr %s175, 8
        %s177 = scalar_lea.vmem [#allocation4], %s176
        %s178 = smul.u32 32, %s21
        %p179 = scmp.lt.s32.totalorder %s178, 63
        %s180 = scalar_select %p179, %s178, 63
        %s181 = smul.addr %s180, 2
        %s182 = smul.addr %s181, 4
        %s183 = scalar_lea.vmem %s0, %s182
        %s184 = smul.u32 32, %s21
        %s185 = smul.u32 32, %s21
        %v187 = vld [vmem:[%s183] sm:$0xff]
        %v188 = vld [vmem:[%s183 + $0x8] sm:$0xff]
        %v189 = vld [vmem:[%s183 + $0x10] sm:$0xff]
        %v190 = vld [vmem:[%s183 + $0x18] sm:$0xff]
        %v191 = vld [vmem:[%s183 + $0x20] sm:$0xff]
        %v192 = vld [vmem:[%s183 + $0x28] sm:$0xff]
        %v193 = vld [vmem:[%s183 + $0x30] sm:$0xff]
        %v194 = vld [vmem:[%s183 + $0x38] sm:$0xff]
        %v195 = vld [vmem:[%s183 + $0x40] sm:$0xff]
        %v196 = vld [vmem:[%s183 + $0x48] sm:$0xff]
        %v197 = vld [vmem:[%s183 + $0x50] sm:$0xff]
        %v198 = vld [vmem:[%s183 + $0x58] sm:$0xff]
        %v199 = vld [vmem:[%s183 + $0x60] sm:$0xff]
        %v200 = vld [vmem:[%s183 + $0x68] sm:$0xff]
        %v201 = vld [vmem:[%s183 + $0x70] sm:$0xff]
        %v202 = vld [vmem:[%s183 + $0x78] sm:$0xff]
        %v203 = vld [vmem:[%s183 + $0x80] sm:$0xff]
        %v204 = vld [vmem:[%s183 + $0x88] sm:$0xff]
        %v205 = vld [vmem:[%s183 + $0x90] sm:$0xff]
        %v206 = vld [vmem:[%s183 + $0x98] sm:$0xff]
        %v207 = vld [vmem:[%s183 + $0xa0] sm:$0xff]
        %v208 = vld [vmem:[%s183 + $0xa8] sm:$0xff]
        %v209 = vld [vmem:[%s183 + $0xb0] sm:$0xff]
        %v210 = vld [vmem:[%s183 + $0xb8] sm:$0xff]
        %v211 = vld [vmem:[%s183 + $0xc0] sm:$0xff]
        %v212 = vld [vmem:[%s183 + $0xc8] sm:$0xff]
        %v213 = vld [vmem:[%s183 + $0xd0] sm:$0xff]
        %v214 = vld [vmem:[%s183 + $0xd8] sm:$0xff]
        %v215 = vld [vmem:[%s183 + $0xe0] sm:$0xff]
        %v216 = vld [vmem:[%s183 + $0xe8] sm:$0xff]
        %v217 = vld [vmem:[%s183 + $0xf0] sm:$0xff]
        %v218 = vld [vmem:[%s183 + $0xf8] sm:$0xff]
        %v219 = vld [vmem:[%s1] sm:$0xf]
        %v220 = vld [vmem:[%s1 + $0x4] sm:$0xf]
        %v221 = vld [vmem:[%s1 + $0x8] sm:$0xf]
        %v222 = vld [vmem:[%s1 + $0xc] sm:$0xf]
        %v223 = vld [vmem:[%s1 + $0x10] sm:$0xf]
        %v224 = vld [vmem:[%s1 + $0x14] sm:$0xf]
        %v225 = vld [vmem:[%s1 + $0x18] sm:$0xf]
        %v226 = vld [vmem:[%s1 + $0x1c] sm:$0xf]
        %v227 = vld [vmem:[%s1 + $0x20] sm:$0xf]
        %v228 = vld [vmem:[%s1 + $0x24] sm:$0xf]
        %v229 = vld [vmem:[%s1 + $0x28] sm:$0xf]
        %v230 = vld [vmem:[%s1 + $0x2c] sm:$0xf]
        %v231 = vld [vmem:[%s1 + $0x30] sm:$0xf]
        %v232 = vld [vmem:[%s1 + $0x34] sm:$0xf]
        %v233 = vld [vmem:[%s1 + $0x38] sm:$0xf]
        %v234 = vld [vmem:[%s1 + $0x3c] sm:$0xf]
        %v235 = vld [vmem:[%s1 + $0x40] sm:$0xf]
        %v236 = vld [vmem:[%s1 + $0x44] sm:$0xf]
        %v237 = vld [vmem:[%s1 + $0x48] sm:$0x3]
        %v270 = vunpack.c.l.b16 %v187
        %v271 = vunpack.c.h.b16 %v187
        %v272 = vunpack.c.l.b16 %v188
        %v273 = vunpack.c.h.b16 %v188
        %v274 = vunpack.c.l.b16 %v189
        %v275 = vunpack.c.h.b16 %v189
        %v276 = vunpack.c.l.b16 %v190
        %v277 = vunpack.c.h.b16 %v190
        %v278 = vunpack.c.l.b16 %v191
        %v279 = vunpack.c.h.b16 %v191
        %v280 = vunpack.c.l.b16 %v192
        %v281 = vunpack.c.h.b16 %v192
        %v282 = vunpack.c.l.b16 %v193
        %v283 = vunpack.c.h.b16 %v193
        %v284 = vunpack.c.l.b16 %v194
        %v285 = vunpack.c.h.b16 %v194
        %v286 = vunpack.c.l.b16 %v195
        %v287 = vunpack.c.h.b16 %v195
        %v288 = vunpack.c.l.b16 %v196
        %v289 = vunpack.c.h.b16 %v196
        %v290 = vunpack.c.l.b16 %v197
        %v291 = vunpack.c.h.b16 %v197
        %v292 = vunpack.c.l.b16 %v198
        %v293 = vunpack.c.h.b16 %v198
        %v294 = vunpack.c.l.b16 %v199
        %v295 = vunpack.c.h.b16 %v199
        %v296 = vunpack.c.l.b16 %v200
        %v297 = vunpack.c.h.b16 %v200
        %v298 = vunpack.c.l.b16 %v201
        %v299 = vunpack.c.h.b16 %v201
        %v300 = vunpack.c.l.b16 %v202
        %v301 = vunpack.c.h.b16 %v202
        %v302 = vunpack.c.l.b16 %v203
        %v303 = vunpack.c.h.b16 %v203
        %v304 = vunpack.c.l.b16 %v204
        %v305 = vunpack.c.h.b16 %v204
        %v306 = vunpack.c.l.b16 %v205
        %v307 = vunpack.c.h.b16 %v205
        %v308 = vunpack.c.l.b16 %v206
        %v309 = vunpack.c.h.b16 %v206
        %v310 = vunpack.c.l.b16 %v207
        %v311 = vunpack.c.h.b16 %v207
        %v312 = vunpack.c.l.b16 %v208
        %v313 = vunpack.c.h.b16 %v208
        %v314 = vunpack.c.l.b16 %v209
        %v315 = vunpack.c.h.b16 %v209
        %v316 = vunpack.c.l.b16 %v210
        %v317 = vunpack.c.h.b16 %v210
        %v318 = vunpack.c.l.b16 %v211
        %v319 = vunpack.c.h.b16 %v211
        %v320 = vunpack.c.l.b16 %v212
        %v321 = vunpack.c.h.b16 %v212
        %v322 = vunpack.c.l.b16 %v213
        %v323 = vunpack.c.h.b16 %v213
        %v324 = vunpack.c.l.b16 %v214
        %v325 = vunpack.c.h.b16 %v214
        %v326 = vunpack.c.l.b16 %v215
        %v327 = vunpack.c.h.b16 %v215
        %v328 = vunpack.c.l.b16 %v216
        %v329 = vunpack.c.h.b16 %v216
        %v330 = vunpack.c.l.b16 %v217
        %v331 = vunpack.c.h.b16 %v217
        %v332 = vunpack.c.l.b16 %v218
        %v333 = vunpack.c.h.b16 %v218
        %v334 = vpack.c.b16 %v272, %v270
        %v335 = vpack.c.b16 %v273, %v271
        %v336 = vpack.c.b16 %v276, %v274
        %v337 = vpack.c.b16 %v277, %v275
        %v338 = vpack.c.b16 %v280, %v278
        %v339 = vpack.c.b16 %v281, %v279
        %v340 = vpack.c.b16 %v284, %v282
        %v341 = vpack.c.b16 %v285, %v283
        %v342 = vpack.c.b16 %v288, %v286
        %v343 = vpack.c.b16 %v289, %v287
        %v344 = vpack.c.b16 %v292, %v290
        %v345 = vpack.c.b16 %v293, %v291
        %v346 = vpack.c.b16 %v296, %v294
        %v347 = vpack.c.b16 %v297, %v295
        %v348 = vpack.c.b16 %v300, %v298
        %v349 = vpack.c.b16 %v301, %v299
        %v350 = vpack.c.b16 %v304, %v302
        %v351 = vpack.c.b16 %v305, %v303
        %v352 = vpack.c.b16 %v308, %v306
        %v353 = vpack.c.b16 %v309, %v307
        %v354 = vpack.c.b16 %v312, %v310
        %v355 = vpack.c.b16 %v313, %v311
        %v356 = vpack.c.b16 %v316, %v314
        %v357 = vpack.c.b16 %v317, %v315
        %v358 = vpack.c.b16 %v320, %v318
        %v359 = vpack.c.b16 %v321, %v319
        %v360 = vpack.c.b16 %v324, %v322
        %v361 = vpack.c.b16 %v325, %v323
        %v362 = vpack.c.b16 %v328, %v326
        %v363 = vpack.c.b16 %v329, %v327
        %v364 = vpack.c.b16 %v332, %v330
        %v365 = vpack.c.b16 %v333, %v331
        %v401 = vunpack.c.l.b16 %v219
        %v402 = vunpack.c.l.b16 %v220
        %v403 = vunpack.c.l.b16 %v221
        %v404 = vunpack.c.l.b16 %v222
        %v405 = vunpack.c.l.b16 %v223
        %v406 = vunpack.c.l.b16 %v224
        %v407 = vunpack.c.l.b16 %v225
        %v408 = vunpack.c.l.b16 %v226
        %v409 = vunpack.c.l.b16 %v227
        %v410 = vunpack.c.l.b16 %v228
        %v411 = vunpack.c.l.b16 %v229
        %v412 = vunpack.c.l.b16 %v230
        %v413 = vunpack.c.l.b16 %v231
        %v414 = vunpack.c.l.b16 %v232
        %v415 = vunpack.c.l.b16 %v233
        %v416 = vunpack.c.l.b16 %v234
        %v417 = vunpack.c.l.b16 %v235
        %v418 = vunpack.c.l.b16 %v236
        %v419 = vunpack.c.l.b16 %v237
        %v420 = vpack.c.b16 %v402, %v401
        %v421 = vpack.c.b16 %v404, %v403
        %v422 = vpack.c.b16 %v406, %v405
        %v423 = vpack.c.b16 %v408, %v407
        %v424 = vpack.c.b16 %v410, %v409
        %v425 = vpack.c.b16 %v412, %v411
        %v426 = vpack.c.b16 %v414, %v413
        %v427 = vpack.c.b16 %v416, %v415
        %v428 = vpack.c.b16 %v418, %v417
        %v429 = vpack.c.b16 %v419, %v419
        %vm439 = vcmask 154624
        %v441 = vsel %vm439, %v335, 0
        %v444 = vsel %vm439, %v337, 0
        %v447 = vsel %vm439, %v339, 0
        %v450 = vsel %vm439, %v341, 0
        %v453 = vsel %vm439, %v343, 0
        %v456 = vsel %vm439, %v345, 0
        %v459 = vsel %vm439, %v347, 0
        %v462 = vsel %vm439, %v349, 0
        %v465 = vsel %vm439, %v351, 0
        %v468 = vsel %vm439, %v353, 0
        %v471 = vsel %vm439, %v355, 0
        %v474 = vsel %vm439, %v357, 0
        %v477 = vsel %vm439, %v359, 0
        %v480 = vsel %vm439, %v361, 0
        %v483 = vsel %vm439, %v363, 0
        %v486 = vsel %vm439, %v365, 0
        %vm488 = vcmask 1040384
        %vm489 = vcmask 1041408
        %v490 = vsel %vm488, 4294967295, 65535
        %v491 = vsel %vm489, %v490, 0
        %v493 = vand.u32 %v429, %v491
        %495 = vmatprep.subr.bf16.mxu0 0
        %496 = vmatpush1.bf16.msra.mxu0 %v420
        %497 = vmatprep.subr.bf16.mxu0 0
        %498 = vmatpush1.bf16.msra.mxu0 %v421
        %499 = vmatprep.subr.bf16.mxu0 0
        %500 = vmatpush1.bf16.msra.mxu0 %v422
        %501 = vmatprep.subr.bf16.mxu0 0
        %502 = vmatpush1.bf16.msra.mxu0 %v423
        %503 = vmatprep.subr.bf16.mxu0 0
        %504 = vmatpush1.bf16.msra.mxu0 %v424
        %505 = vmatprep.subr.bf16.mxu0 0
        %506 = vmatpush1.bf16.msra.mxu0 %v425
        %507 = vmatprep.subr.bf16.mxu0 0
        %508 = vmatpush1.bf16.msra.mxu0 %v426
        %509 = vmatprep.subr.bf16.mxu0 0
        %510 = vmatpush1.bf16.msra.mxu0 %v427
        %511 = vmatprep.subr.bf16.mxu0 0
        %512 = vmatpush1.bf16.msra.mxu0 %v428
        %513 = vmatprep.subr.bf16.mxu0 0
        %514 = vmatpush1.bf16.msra.mxu0 %v493
        %515 = vmatprep.subr.bf16.mxu0 0
        %516 = vmatpush1.bf16.msra.mxu0 0
        %517 = vmatprep.subr.bf16.mxu0 0
        %518 = vmatpush1.bf16.msra.mxu0 0
        %519 = vmatprep.subr.bf16.mxu0 0
        %520 = vmatpush1.bf16.msra.mxu0 0
        %521 = vmatprep.subr.bf16.mxu0 0
        %522 = vmatpush1.bf16.msra.mxu0 0
        %523 = vmatprep.subr.bf16.mxu0 0
        %524 = vmatpush1.bf16.msra.mxu0 0
        %525 = vmatprep.subr.bf16.mxu0 0
        %526 = vmatpush1.bf16.msra.mxu0 0
        %527 = vmatprep.mubr.bf16.mxu0 %v441
        %528 = vmatmul.mubr.bf16.gmra.mrb[0].mxu0 %v334
        %v529 = vpop.f32.mrb[0].mxu0
        %v530 = vadd.f32 0.0, %v529
        %v531 = vpop.f32.mrb[0].mxu0
        %v532 = vpop.f32.mrb[0].mxu0
        %v533 = vadd.f32 0.0, %v532
        %v534 = vpop.f32.mrb[0].mxu0
        %535 = vmatprep.mubr.bf16.mxu0 %v444
        %536 = vmatmul.mubr.bf16.gmra.mrb[0].mxu0 %v336
        %v537 = vpop.f32.mrb[0].mxu0
        %v538 = vadd.f32 0.0, %v537
        %v539 = vpop.f32.mrb[0].mxu0
        %v540 = vpop.f32.mrb[0].mxu0
        %v541 = vadd.f32 0.0, %v540
        %v542 = vpop.f32.mrb[0].mxu0
        %543 = vmatprep.mubr.bf16.mxu0 %v447
        %544 = vmatmul.mubr.bf16.gmra.mrb[0].mxu0 %v338
        %v545 = vpop.f32.mrb[0].mxu0
        %v546 = vadd.f32 0.0, %v545
        %v547 = vpop.f32.mrb[0].mxu0
        %v548 = vpop.f32.mrb[0].mxu0
        %v549 = vadd.f32 0.0, %v548
        %v550 = vpop.f32.mrb[0].mxu0
        %551 = vmatprep.mubr.bf16.mxu0 %v450
        %552 = vmatmul.mubr.bf16.gmra.mrb[0].mxu0 %v340
        %v553 = vpop.f32.mrb[0].mxu0
        %v554 = vadd.f32 0.0, %v553
        %v555 = vpop.f32.mrb[0].mxu0
        %v556 = vpop.f32.mrb[0].mxu0
        %v557 = vadd.f32 0.0, %v556
        %v558 = vpop.f32.mrb[0].mxu0
        %559 = vmatprep.mubr.bf16.mxu0 %v453
        %560 = vmatmul.mubr.bf16.gmra.mrb[0].mxu0 %v342
        %v561 = vpop.f32.mrb[0].mxu0
        %v562 = vadd.f32 0.0, %v561
        %v563 = vpop.f32.mrb[0].mxu0
        %v564 = vpop.f32.mrb[0].mxu0
        %v565 = vadd.f32 0.0, %v564
        %v566 = vpop.f32.mrb[0].mxu0
        %567 = vmatprep.mubr.bf16.mxu0 %v456
        %568 = vmatmul.mubr.bf16.gmra.mrb[0].mxu0 %v344
        %v569 = vpop.f32.mrb[0].mxu0
        %v570 = vadd.f32 0.0, %v569
        %v571 = vpop.f32.mrb[0].mxu0
        %v572 = vpop.f32.mrb[0].mxu0
        %v573 = vadd.f32 0.0, %v572
        %v574 = vpop.f32.mrb[0].mxu0
        %575 = vmatprep.mubr.bf16.mxu0 %v459
        %576 = vmatmul.mubr.bf16.gmra.mrb[0].mxu0 %v346
        %v577 = vpop.f32.mrb[0].mxu0
        %v578 = vadd.f32 0.0, %v577
        %v579 = vpop.f32.mrb[0].mxu0
        %v580 = vpop.f32.mrb[0].mxu0
        %v581 = vadd.f32 0.0, %v580
        %v582 = vpop.f32.mrb[0].mxu0
        %583 = vmatprep.mubr.bf16.mxu0 %v462
        %584 = vmatmul.mubr.bf16.gmra.mrb[0].mxu0 %v348
        %v585 = vpop.f32.mrb[0].mxu0
        %v586 = vadd.f32 0.0, %v585
        %v587 = vpop.f32.mrb[0].mxu0
        %v588 = vpop.f32.mrb[0].mxu0
        %v589 = vadd.f32 0.0, %v588
        %v590 = vpop.f32.mrb[0].mxu0
        %591 = vmatprep.mubr.bf16.mxu0 %v465
        %592 = vmatmul.mubr.bf16.gmra.mrb[0].mxu0 %v350
        %v593 = vpop.f32.mrb[0].mxu0
        %v594 = vadd.f32 0.0, %v593
        %v595 = vpop.f32.mrb[0].mxu0
        %v596 = vpop.f32.mrb[0].mxu0
        %v597 = vadd.f32 0.0, %v596
        %v598 = vpop.f32.mrb[0].mxu0
        %599 = vmatprep.mubr.bf16.mxu0 %v468
        %600 = vmatmul.mubr.bf16.gmra.mrb[0].mxu0 %v352
        %v601 = vpop.f32.mrb[0].mxu0
        %v602 = vadd.f32 0.0, %v601
        %v603 = vpop.f32.mrb[0].mxu0
        %v604 = vpop.f32.mrb[0].mxu0
        %v605 = vadd.f32 0.0, %v604
        %v606 = vpop.f32.mrb[0].mxu0
        %607 = vmatprep.mubr.bf16.mxu0 %v471
        %608 = vmatmul.mubr.bf16.gmra.mrb[0].mxu0 %v354
        %v609 = vpop.f32.mrb[0].mxu0
        %v610 = vadd.f32 0.0, %v609
        %v611 = vpop.f32.mrb[0].mxu0
        %v612 = vpop.f32.mrb[0].mxu0
        %v613 = vadd.f32 0.0, %v612
        %v614 = vpop.f32.mrb[0].mxu0
        %615 = vmatprep.mubr.bf16.mxu0 %v474
        %616 = vmatmul.mubr.bf16.gmra.mrb[0].mxu0 %v356
        %v617 = vpop.f32.mrb[0].mxu0
        %v618 = vadd.f32 0.0, %v617
        %v619 = vpop.f32.mrb[0].mxu0
        %v620 = vpop.f32.mrb[0].mxu0
        %v621 = vadd.f32 0.0, %v620
        %v622 = vpop.f32.mrb[0].mxu0
        %623 = vmatprep.mubr.bf16.mxu0 %v477
        %624 = vmatmul.mubr.bf16.gmra.mrb[0].mxu0 %v358
        %v625 = vpop.f32.mrb[0].mxu0
        %v626 = vadd.f32 0.0, %v625
        %v627 = vpop.f32.mrb[0].mxu0
        %v628 = vpop.f32.mrb[0].mxu0
        %v629 = vadd.f32 0.0, %v628
        %v630 = vpop.f32.mrb[0].mxu0
        %631 = vmatprep.mubr.bf16.mxu0 %v480
        %632 = vmatmul.mubr.bf16.gmra.mrb[0].mxu0 %v360
        %v633 = vpop.f32.mrb[0].mxu0
        %v634 = vadd.f32 0.0, %v633
        %v635 = vpop.f32.mrb[0].mxu0
        %v636 = vpop.f32.mrb[0].mxu0
        %v637 = vadd.f32 0.0, %v636
        %v638 = vpop.f32.mrb[0].mxu0
        %639 = vmatprep.mubr.bf16.mxu0 %v483
        %640 = vmatmul.mubr.bf16.gmra.mrb[0].mxu0 %v362
        %v641 = vpop.f32.mrb[0].mxu0
        %v642 = vadd.f32 0.0, %v641
        %v643 = vpop.f32.mrb[0].mxu0
        %v644 = vpop.f32.mrb[0].mxu0
        %v645 = vadd.f32 0.0, %v644
        %v646 = vpop.f32.mrb[0].mxu0
        %647 = vmatprep.mubr.bf16.mxu0 %v486
        %648 = vmatmul.mubr.bf16.gmra.mrb[0].mxu0 %v364
        %v649 = vpop.f32.mrb[0].mxu0
        %v650 = vadd.f32 0.0, %v649
        %v651 = vpop.f32.mrb[0].mxu0
        %v652 = vpop.f32.mrb[0].mxu0
        %v653 = vadd.f32 0.0, %v652
        %v654 = vpop.f32.mrb[0].mxu0
        %655 = vdwg.mxu0
        %v656 = vpack.c.bf16 %v533, %v530
        %v657 = vpack.c.bf16 %v541, %v538
        %v658 = vpack.c.bf16 %v549, %v546
        %v659 = vpack.c.bf16 %v557, %v554
        %v660 = vpack.c.bf16 %v565, %v562
        %v661 = vpack.c.bf16 %v573, %v570
        %v662 = vpack.c.bf16 %v581, %v578
        %v663 = vpack.c.bf16 %v589, %v586
        %v664 = vpack.c.bf16 %v597, %v594
        %v665 = vpack.c.bf16 %v605, %v602
        %v666 = vpack.c.bf16 %v613, %v610
        %v667 = vpack.c.bf16 %v621, %v618
        %v668 = vpack.c.bf16 %v629, %v626
        %v669 = vpack.c.bf16 %v637, %v634
        %v670 = vpack.c.bf16 %v645, %v642
        %v671 = vpack.c.bf16 %v653, %v650
        %v688 = vunpack.c.l.b16 %v656
        %v689 = vunpack.c.h.b16 %v656
        %v690 = vunpack.c.l.b16 %v657
        %v691 = vunpack.c.h.b16 %v657
        %v692 = vunpack.c.l.b16 %v658
        %v693 = vunpack.c.h.b16 %v658
        %v694 = vunpack.c.l.b16 %v659
        %v695 = vunpack.c.h.b16 %v659
        %v696 = vunpack.c.l.b16 %v660
        %v697 = vunpack.c.h.b16 %v660
        %v698 = vunpack.c.l.b16 %v661
        %v699 = vunpack.c.h.b16 %v661
        %v700 = vunpack.c.l.b16 %v662
        %v701 = vunpack.c.h.b16 %v662
        %v702 = vunpack.c.l.b16 %v663
        %v703 = vunpack.c.h.b16 %v663
        %v704 = vunpack.c.l.b16 %v664
        %v705 = vunpack.c.h.b16 %v664
        %v706 = vunpack.c.l.b16 %v665
        %v707 = vunpack.c.h.b16 %v665
        %v708 = vunpack.c.l.b16 %v666
        %v709 = vunpack.c.h.b16 %v666
        %v710 = vunpack.c.l.b16 %v667
        %v711 = vunpack.c.h.b16 %v667
        %v712 = vunpack.c.l.b16 %v668
        %v713 = vunpack.c.h.b16 %v668
        %v714 = vunpack.c.l.b16 %v669
        %v715 = vunpack.c.h.b16 %v669
        %v716 = vunpack.c.l.b16 %v670
        %v717 = vunpack.c.h.b16 %v670
        %v718 = vunpack.c.l.b16 %v671
        %v719 = vunpack.c.h.b16 %v671
        %v720 = vpack.c.b16 %v688, %v688
        %v721 = vpack.c.b16 %v689, %v689
        %v722 = vpack.c.b16 %v690, %v690
        %v723 = vpack.c.b16 %v691, %v691
        %v724 = vpack.c.b16 %v692, %v692
        %v725 = vpack.c.b16 %v693, %v693
        %v726 = vpack.c.b16 %v694, %v694
        %v727 = vpack.c.b16 %v695, %v695
        %v728 = vpack.c.b16 %v696, %v696
        %v729 = vpack.c.b16 %v697, %v697
        %v730 = vpack.c.b16 %v698, %v698
        %v731 = vpack.c.b16 %v699, %v699
        %v732 = vpack.c.b16 %v700, %v700
        %v733 = vpack.c.b16 %v701, %v701
        %v734 = vpack.c.b16 %v702, %v702
        %v735 = vpack.c.b16 %v703, %v703
        %v736 = vpack.c.b16 %v704, %v704
        %v737 = vpack.c.b16 %v705, %v705
        %v738 = vpack.c.b16 %v706, %v706
        %v739 = vpack.c.b16 %v707, %v707
        %v740 = vpack.c.b16 %v708, %v708
        %v741 = vpack.c.b16 %v709, %v709
        %v742 = vpack.c.b16 %v710, %v710
        %v743 = vpack.c.b16 %v711, %v711
        %v744 = vpack.c.b16 %v712, %v712
        %v745 = vpack.c.b16 %v713, %v713
        %v746 = vpack.c.b16 %v714, %v714
        %v747 = vpack.c.b16 %v715, %v715
        %v748 = vpack.c.b16 %v716, %v716
        %v749 = vpack.c.b16 %v717, %v717
        %v750 = vpack.c.b16 %v718, %v718
        %v751 = vpack.c.b16 %v719, %v719
        %784 = vst [vmem:[%s170] sm:$0xf] %v720
        %785 = vst [vmem:[%s170 + $0x4] sm:$0xf] %v721
        %786 = vst [vmem:[%s170 + $0x8] sm:$0xf] %v722
        %787 = vst [vmem:[%s170 + $0xc] sm:$0xf] %v723
        %788 = vst [vmem:[%s170 + $0x10] sm:$0xf] %v724
        %789 = vst [vmem:[%s170 + $0x14] sm:$0xf] %v725
        %790 = vst [vmem:[%s170 + $0x18] sm:$0xf] %v726
        %791 = vst [vmem:[%s170 + $0x1c] sm:$0xf] %v727
        %792 = vst [vmem:[%s170 + $0x20] sm:$0xf] %v728
        %793 = vst [vmem:[%s170 + $0x24] sm:$0xf] %v729
        %794 = vst [vmem:[%s170 + $0x28] sm:$0xf] %v730
        %795 = vst [vmem:[%s170 + $0x2c] sm:$0xf] %v731
        %796 = vst [vmem:[%s170 + $0x30] sm:$0xf] %v732
        %797 = vst [vmem:[%s170 + $0x34] sm:$0xf] %v733
        %798 = vst [vmem:[%s170 + $0x38] sm:$0xf] %v734
        %799 = vst [vmem:[%s170 + $0x3c] sm:$0xf] %v735
        %800 = vst [vmem:[%s170 + $0x40] sm:$0xf] %v736
        %801 = vst [vmem:[%s170 + $0x44] sm:$0xf] %v737
        %802 = vst [vmem:[%s170 + $0x48] sm:$0xf] %v738
        %803 = vst [vmem:[%s170 + $0x4c] sm:$0xf] %v739
        %804 = vst [vmem:[%s170 + $0x50] sm:$0xf] %v740
        %805 = vst [vmem:[%s170 + $0x54] sm:$0xf] %v741
        %806 = vst [vmem:[%s170 + $0x58] sm:$0xf] %v742
        %807 = vst [vmem:[%s170 + $0x5c] sm:$0xf] %v743
        %808 = vst [vmem:[%s170 + $0x60] sm:$0xf] %v744
        %809 = vst [vmem:[%s170 + $0x64] sm:$0xf] %v745
        %810 = vst [vmem:[%s170 + $0x68] sm:$0xf] %v746
        %811 = vst [vmem:[%s170 + $0x6c] sm:$0xf] %v747
        %812 = vst [vmem:[%s170 + $0x70] sm:$0xf] %v748
        %813 = vst [vmem:[%s170 + $0x74] sm:$0xf] %v749
        %814 = vst [vmem:[%s170 + $0x78] sm:$0xf] %v750
        %815 = vst [vmem:[%s170 + $0x7c] sm:$0xf] %v751
        %v816 = vadd.f32 %v530, %v533
        %v817 = vadd.f32 %v816, %v538
        %v818 = vadd.f32 %v817, %v541
        %v819 = vadd.f32 %v818, %v546
        %v820 = vadd.f32 %v819, %v549
        %v821 = vadd.f32 %v820, %v554
        %v822 = vadd.f32 %v821, %v557
        %v823 = vadd.f32 %v822, %v562
        %v824 = vadd.f32 %v823, %v565
        %v825 = vadd.f32 %v824, %v570
        %v826 = vadd.f32 %v825, %v573
        %v827 = vadd.f32 %v826, %v578
        %v828 = vadd.f32 %v827, %v581
        %v829 = vadd.f32 %v828, %v586
        %v830 = vadd.f32 %v829, %v589
        %v831 = vadd.f32 %v830, %v594
        %v832 = vadd.f32 %v831, %v597
        %v833 = vadd.f32 %v832, %v602
        %v834 = vadd.f32 %v833, %v605
        %v835 = vadd.f32 %v834, %v610
        %v836 = vadd.f32 %v835, %v613
        %v837 = vadd.f32 %v836, %v618
        %v838 = vadd.f32 %v837, %v621
        %v839 = vadd.f32 %v838, %v626
        %v840 = vadd.f32 %v839, %v629
        %v841 = vadd.f32 %v840, %v634
        %v842 = vadd.f32 %v841, %v637
        %v843 = vadd.f32 %v842, %v642
        %v844 = vadd.f32 %v843, %v645
        %v845 = vadd.f32 %v844, %v650
        %v846 = vadd.f32 %v845, %v653
        %v847 = vrot.slane %v846, 4
        %v848 = vadd.f32 %v846, %v847
        %v849 = vrot.slane %v848, 2
        %v850 = vadd.f32 %v848, %v849
        %v851 = vrot.slane %v850, 1
        %v852 = vadd.f32 %v850, %v851
        %v853 = vmul.f32 %v530, %v530
        %v854 = vmul.f32 %v533, %v533
        %v855 = vmul.f32 %v538, %v538
        %v856 = vmul.f32 %v541, %v541
        %v857 = vmul.f32 %v546, %v546
        %v858 = vmul.f32 %v549, %v549
        %v859 = vmul.f32 %v554, %v554
        %v860 = vmul.f32 %v557, %v557
        %v861 = vmul.f32 %v562, %v562
        %v862 = vmul.f32 %v565, %v565
        %v863 = vmul.f32 %v570, %v570
        %v864 = vmul.f32 %v573, %v573
        %v865 = vmul.f32 %v578, %v578
        %v866 = vmul.f32 %v581, %v581
        %v867 = vmul.f32 %v586, %v586
        %v868 = vmul.f32 %v589, %v589
        %v869 = vmul.f32 %v594, %v594
        %v870 = vmul.f32 %v597, %v597
        %v871 = vmul.f32 %v602, %v602
        %v872 = vmul.f32 %v605, %v605
        %v873 = vmul.f32 %v610, %v610
        %v874 = vmul.f32 %v613, %v613
        %v875 = vmul.f32 %v618, %v618
        %v876 = vmul.f32 %v621, %v621
        %v877 = vmul.f32 %v626, %v626
        %v878 = vmul.f32 %v629, %v629
        %v879 = vmul.f32 %v634, %v634
        %v880 = vmul.f32 %v637, %v637
        %v881 = vmul.f32 %v642, %v642
        %v882 = vmul.f32 %v645, %v645
        %v883 = vmul.f32 %v650, %v650
        %v884 = vmul.f32 %v653, %v653
        %v885 = vadd.f32 %v853, %v854
        %v886 = vadd.f32 %v885, %v855
        %v887 = vadd.f32 %v886, %v856
        %v888 = vadd.f32 %v887, %v857
        %v889 = vadd.f32 %v888, %v858
        %v890 = vadd.f32 %v889, %v859
        %v891 = vadd.f32 %v890, %v860
        %v892 = vadd.f32 %v891, %v861
        %v893 = vadd.f32 %v892, %v862
        %v894 = vadd.f32 %v893, %v863
        %v895 = vadd.f32 %v894, %v864
        %v896 = vadd.f32 %v895, %v865
        %v897 = vadd.f32 %v896, %v866
        %v898 = vadd.f32 %v897, %v867
        %v899 = vadd.f32 %v898, %v868
        %v900 = vadd.f32 %v899, %v869
        %v901 = vadd.f32 %v900, %v870
        %v902 = vadd.f32 %v901, %v871
        %v903 = vadd.f32 %v902, %v872
        %v904 = vadd.f32 %v903, %v873
        %v905 = vadd.f32 %v904, %v874
        %v906 = vadd.f32 %v905, %v875
        %v907 = vadd.f32 %v906, %v876
        %v908 = vadd.f32 %v907, %v877
        %v909 = vadd.f32 %v908, %v878
        %v910 = vadd.f32 %v909, %v879
        %v911 = vadd.f32 %v910, %v880
        %v912 = vadd.f32 %v911, %v881
        %v913 = vadd.f32 %v912, %v882
        %v914 = vadd.f32 %v913, %v883
        %v915 = vadd.f32 %v914, %v884
        %v916 = vrot.slane %v915, 4
        %v917 = vadd.f32 %v915, %v916
        %v918 = vrot.slane %v917, 2
        %v919 = vadd.f32 %v917, %v918
        %v920 = vrot.slane %v919, 1
        %v921 = vadd.f32 %v919, %v920
        %v922 = vsel %vm488, %v852, %v921
        %v923 = vsel %vm489, %v922, 0.0
        %924 = vst [vmem:[%s177] sm:$0xff] %v923
        %s925 = sand.u32 %s76, 1
        %s926 = scalar_lea.sflag [#allocation3], %s925
        %s927 = sand.u32 %s76, 1
        %s928 = smul.addr %s927, 128
        %s929 = scalar_lea.vmem [#allocation2], %s928
        %s930 = sand.u32 %s102, 1
        %s931 = scalar_lea.sflag [#allocation5], %s930
        %s932 = sand.u32 %s102, 1
        %s933 = smul.addr %s932, 8
        %s934 = scalar_lea.vmem [#allocation4], %s933
        // Predicated region
        $region29: #{tpu_custom_call.1} parent=27 // pred_check
          %p935 = pneg %p86
        $region30: #{tpu_custom_call.1} parent=27 // pred_check_branch
          %937 = sbr.rel (%p935) target = $region32
        $region31: #{tpu_custom_call.1} parent=27 // pred_region
          %s938 = smul.u32 32, %s21
          %s940 = ssub.s32 2048, 2048
          %941 = vsyncadd %s926, %s940
          %s942 = smul.addr %s938, 64
          %s943 = scalar_lea.hbm %s2, %s942
          %s944 = sshll.u32 %s929, 4
          %s945 = int_to_ptr.vmem [resolvable:$true] %s944
          %950 = dma.vmem_to_hbm [thread:$0]  %s945, 2048, %s943, %s926, 64, 64, 4
        $region32: #{tpu_custom_call.1} parent=27 // pred_fallthru
          _
        // Predicated region
        $region33: #{tpu_custom_call.1} parent=27 // pred_check
          %p951 = pneg %p112
        $region34: #{tpu_custom_call.1} parent=27 // pred_check_branch
          %953 = sbr.rel (%p951) target = $region36
        $region35: #{tpu_custom_call.1} parent=27 // pred_region
          %s955 = ssub.s32 128, 128
          %956 = vsyncadd %s931, %s955
          %s957 = smul.addr %s21, 128
          %s958 = scalar_lea.hbm %s3, %s957
          %s960 = sshll.u32 %s934, 4
          %s961 = int_to_ptr.vmem [resolvable:$true] %s960
          %963 = dma.vmem_to_hbm [thread:$0]  %s961, 128, %s958, %s931
        $region36: #{tpu_custom_call.1} parent=27 // pred_fallthru
          _
      $region28: #{tpu_custom_call.1} parent=5 // pred_fallthru
        _
      %p964 = scmp.le.s32.totalorder 2, %s16
      // Predicated region
      $region37: #{tpu_custom_call.1} parent=5 // pred_check
        %p965 = pneg %p964
      $region38: #{tpu_custom_call.1} parent=5 // pred_check_branch
        %967 = sbr.rel (%p965) target = $region40
      $region39: #{tpu_custom_call.1} parent=5 // pred_region
        %s968 = ssub.s32 %s16, 2
        // Predicated region
        $region41: #{tpu_custom_call.1} parent=39 // pred_check
          %p969 = pneg %p92
        $region42: #{tpu_custom_call.1} parent=39 // pred_check_branch
          %971 = sbr.rel (%p969) target = $region44
        $region43: #{tpu_custom_call.1} parent=39 // pred_region
          %s972 = sand.u32 %s77, 1
          %s973 = scalar_lea.sflag [#allocation3], %s972
          %s974 = sand.u32 %s77, 1
          %s975 = smul.addr %s974, 128
          %s976 = scalar_lea.vmem [#allocation2], %s975
          %977 = dma.done %s973, 2048
        $region44: #{tpu_custom_call.1} parent=39 // pred_fallthru
          _
        // Predicated region
        $region45: #{tpu_custom_call.1} parent=39 // pred_check
          %p978 = pneg %p118
        $region46: #{tpu_custom_call.1} parent=39 // pred_check_branch
          %980 = sbr.rel (%p978) target = $region48
        $region47: #{tpu_custom_call.1} parent=39 // pred_region
          %s981 = sand.u32 %s103, 1
          %s982 = scalar_lea.sflag [#allocation5], %s981
          %s983 = sand.u32 %s103, 1
          %s984 = smul.addr %s983, 8
          %s985 = scalar_lea.vmem [#allocation4], %s984
          %986 = dma.done %s982, 128
        $region48: #{tpu_custom_call.1} parent=39 // pred_fallthru
          _
      $region40: #{tpu_custom_call.1} parent=5 // pred_fallthru
        _
    $region6: #{tpu_custom_call.1} parent=1 // loop_footer
      %s20 = sadd.s32 1, %s16
    $region7: #{tpu_custom_call.1} parent=1 // loop_footer_branch
      %15 = sbr.rel target = $region3
    $region8: #{tpu_custom_call.1} parent=1 // loop_exit
      _
    %987 = vsyncpa [#allocation3], 1
    %s988 = scalar_lea.sflag [#allocation3], 1
    %989 = vsyncpa %s988, 1
    %990 = vsyncpa [#allocation5], 1
    %s991 = scalar_lea.sflag [#allocation5], 1
    %992 = vsyncpa %s991, 1

</llo_original>
